<compile_context>
chip_gen: v5e
topology: v5e:2x2
jax: 0.10.0
libtpu: 0.0.40
codegen_flags: <defaults>
</compile_context>

<pallas_src>
import functools

import jax
import jax.numpy as jnp
from jax import lax
from jax.experimental import pallas as pl
from jax.experimental.pallas import tpu as pltpu


def _round_up(x: int, m: int) -> int:
    return (x + m - 1) // m * m


def _pick_tile(dim: int, max_tile: int):
    """Pick a lane-legal tile for `dim`. Returns (tile, padded_dim).

    Preference:
      1. full-dim block (dim <= max_tile): no padding; legal even when dim is
         not a multiple of 128 because block_shape == full array dim.
      2. largest 128-multiple <= max_tile that divides dim: no padding.
      3. fallback: 128-aligned max_tile with zero padding (+ depad slice).
    """
    if dim <= max_tile:
        return dim, dim
    t = (max_tile // 128) * 128
    while t >= 128:
        if dim % t == 0:
            return t, dim
        t -= 128
    t = (max_tile // 128) * 128
    return t, _round_up(dim, t)


# ------------------------------ kernels ------------------------------------


def _corr_kernel(a_ref, b_ref, o_ref, *, compute_dtype):
    # a_ref: (c, tm) channel-major A tile, b_ref: (c, tn), o_ref: (tm, tn).
    # Contract over the channel (sublane) axis of BOTH operands so the large
    # spatial dims stay on the lane axis (lane-dense vregs / DMA / stores).
    a = a_ref[...]
    b = b_ref[...]
    if compute_dtype is not None and a.dtype != compute_dtype:
        a = a.astype(compute_dtype)
        b = b.astype(compute_dtype)
    acc = lax.dot_general(
        a,
        b,
        dimension_numbers=(((0,), (0,)), ((), ())),  # A^T . B
        preferred_element_type=jnp.float32,
    )
    o_ref[...] = acc.astype(o_ref.dtype)


def _corr_kernel_ktiled_f32out(a_ref, b_ref, o_ref, *, compute_dtype):
    # Large-c path, f32 output: o_ref block is resident across the k axis
    # (output index_map constant in k), so accumulate directly into it.
    @pl.when(pl.program_id(3) == 0)
    def _():
        o_ref[...] = jnp.zeros_like(o_ref)

    a = a_ref[...]
    b = b_ref[...]
    if compute_dtype is not None and a.dtype != compute_dtype:
        a = a.astype(compute_dtype)
        b = b.astype(compute_dtype)
    o_ref[...] += lax.dot_general(
        a,
        b,
        dimension_numbers=(((0,), (0,)), ((), ())),
        preferred_element_type=jnp.float32,
    )


def _corr_kernel_ktiled_acc(a_ref, b_ref, o_ref, acc_ref, *, compute_dtype):
    # Large-c path, non-f32 output: f32 scratch accumulator + final cast.
    @pl.when(pl.program_id(3) == 0)
    def _():
        acc_ref[...] = jnp.zeros_like(acc_ref)

    a = a_ref[...]
    b = b_ref[...]
    if compute_dtype is not None and a.dtype != compute_dtype:
        a = a.astype(compute_dtype)
        b = b.astype(compute_dtype)
    acc_ref[...] += lax.dot_general(
        a,
        b,
        dimension_numbers=(((0,), (0,)), ((), ())),
        preferred_element_type=jnp.float32,
    )

    @pl.when(pl.program_id(3) == pl.num_programs(3) - 1)
    def _():
        o_ref[...] = acc_ref[...].astype(o_ref.dtype)


# ------------------------------ wrapper -------------------------------------


def feature_correlation(
    featureA: jax.Array,
    featureB: jax.Array,
    *,
    tile_m: int = 1024,
    tile_n: int = 1024,       # v5e/v6e (128 MiB VMEM) may raise to 2048
    tile_k: int = 1024,
    compute_dtype=jnp.bfloat16,   # set to None for a full-f32 parity path
    out_dtype=None,               # None -> match input dtype; bf16 halves writeback
    vmem_limit_bytes: int = 48 * 1024 * 1024,  # safe on v7x (64 MiB physical)
) -> jax.Array:
    """featureA, featureB: (b, c, h, w) NCHW. Returns (b, w*h, h, w)."""
    b, c, h, w = featureA.shape
    M = w * h
    N = h * w
    if out_dtype is None:
        out_dtype = featureA.dtype
    out_dtype = jnp.dtype(out_dtype)

    # Channel-major operands. Only the cheap h<->w spatial swap of the small
    # input tensor remains in the wrapper; the c-to-lane permute of the
    # original permute(0,3,2,1) is folded into the transposed dot.
    #   A_cm[b, c, wi*h + hi] = featureA[b, c, hi, wi]
    a_cm = jnp.swapaxes(featureA, 2, 3).reshape(b, c, M)
    b_cm = featureB.reshape(b, c, N)

    tm, Mp = _pick_tile(M, tile_m)
    tn, Np = _pick_tile(N, tile_n)

    # v7x has 2 TensorCores: guarantee >= 2 parallel grid steps so both run.
    # Harmless on single-TC v5e/v6e.
    if b * (Mp // tm) * (Np // tn) < 2:
        if tm == M and M % 256 == 0:
            tm = M // 2
        elif tn == N and N % 256 == 0:
            tn = N // 2

    use_k_tiling = c > 1024

    # Small-c path: operands are negligible vs the output writeback, so stream
    # them in their native dtype and cast in-kernel (no wrapper pass over A/B).
    # Large-c K-tiled path: operand bytes dominate, cast wrapper-side to halve
    # their DMA traffic.
    if use_k_tiling and compute_dtype is not None and a_cm.dtype != compute_dtype:
        a_cm = a_cm.astype(compute_dtype)
        b_cm = b_cm.astype(compute_dtype)

    if Mp != M:
        a_cm = jnp.pad(a_cm, ((0, 0), (0, 0), (0, Mp - M)))
    if Np != N:
        b_cm = jnp.pad(b_cm, ((0, 0), (0, 0), (0, Np - N)))

    if not use_k_tiling:
        kernel = functools.partial(_corr_kernel, compute_dtype=compute_dtype)
        out = pl.pallas_call(
            kernel,
            out_shape=jax.ShapeDtypeStruct((b, Mp, Np), out_dtype),
            grid_spec=pltpu.PrefetchScalarGridSpec(
                num_scalar_prefetch=0,
                grid=(b, Mp // tm, Np // tn),
                in_specs=[
                    # A tile resident across j (innermost); B re-streamed.
                    # TODO(synk): for large-c compute-heavy configs, pick the
                    # resident operand by size instead.
                    pl.BlockSpec((None, c, tm), lambda bi, i, j: (bi, 0, i)),
                    pl.BlockSpec((None, c, tn), lambda bi, i, j: (bi, 0, j)),
                ],
                out_specs=pl.BlockSpec((None, tm, tn), lambda bi, i, j: (bi, i, j)),
            ),
            compiler_params=pltpu.CompilerParams(
                dimension_semantics=("parallel", "parallel", "parallel"),
                vmem_limit_bytes=vmem_limit_bytes,
            ),
        )(a_cm, b_cm)
    else:
        # Large-c path: K-tile the contraction, accumulator resident across k.
        tk = tile_k
        Cp = _round_up(c, tk)
        if Cp != c:
            a_cm = jnp.pad(a_cm, ((0, 0), (0, Cp - c), (0, 0)))
            b_cm = jnp.pad(b_cm, ((0, 0), (0, Cp - c), (0, 0)))

        if out_dtype == jnp.dtype(jnp.float32):
            kernel = functools.partial(
                _corr_kernel_ktiled_f32out, compute_dtype=compute_dtype)
            scratch = []
        else:
            kernel = functools.partial(
                _corr_kernel_ktiled_acc, compute_dtype=compute_dtype)
            scratch = [pltpu.VMEM((tm, tn), jnp.float32)]

        out = pl.pallas_call(
            kernel,
            out_shape=jax.ShapeDtypeStruct((b, Mp, Np), out_dtype),
            grid_spec=pltpu.PrefetchScalarGridSpec(
                num_scalar_prefetch=0,
                grid=(b, Mp // tm, Np // tn, Cp // tk),
                in_specs=[
                    pl.BlockSpec((None, tk, tm), lambda bi, i, j, k: (bi, k, i)),
                    pl.BlockSpec((None, tk, tn), lambda bi, i, j, k: (bi, k, j)),
                ],
                out_specs=pl.BlockSpec(
                    (None, tm, tn), lambda bi, i, j, k: (bi, i, j)),
                scratch_shapes=scratch,
            ),
            compiler_params=pltpu.CompilerParams(
                dimension_semantics=("parallel", "parallel", "parallel", "arbitrary"),
                vmem_limit_bytes=vmem_limit_bytes,
            ),
        )(a_cm, b_cm)

    if Mp != M or Np != N:
        out = out[:, :M, :N]
    return out.reshape(b, M, h, w)


def feature_correlation_ref(featureA, featureB):
    """Pure-JAX reference matching the PyTorch module exactly (f32 path)."""
    b, c, h, w = featureA.shape
    a = jnp.transpose(featureA, (0, 3, 2, 1)).reshape(b, w * h, c)
    bm = featureB.reshape(b, c, h * w)
    return jnp.einsum(
        "bmc,bcn->bmn", a, bm, preferred_element_type=jnp.float32
    ).reshape(b, w * h, h, w)


if __name__ == "__main__":
    key = jax.random.PRNGKey(0)
    k1, k2 = jax.random.split(key)

    b, c, h, w = 2, 4, 16, 16
    featureA = jax.random.normal(k1, (b, c, h, w), dtype=jnp.float32)
    featureB = jax.random.normal(k2, (b, c, h, w), dtype=jnp.float32)

    # Default path: bf16 operands on the MXU, f32 output (matches module dtype).
    corr = jax.block_until_ready(feature_correlation(featureA, featureB))
    assert corr.shape == (b, w * h, h, w), corr.shape
    assert corr.dtype == jnp.float32

    # Reference with matched bf16 operand precision (f32 accumulation): tight check.
    fa16 = featureA.astype(jnp.bfloat16).astype(jnp.float32)
    fb16 = featureB.astype(jnp.bfloat16).astype(jnp.float32)
    ref_matched = feature_correlation_ref(fa16, fb16)
    assert jnp.allclose(corr, ref_matched, atol=1e-3, rtol=1e-3), \
        "mismatch vs matched-precision reference"

    # Loose sanity check vs the full-f32 reference (bf16 input rounding only).
    ref_f32 = feature_correlation_ref(featureA, featureB)
    assert jnp.allclose(corr, ref_f32, atol=2.5e-1, rtol=5e-2), \
        "mismatch vs f32 reference"

    # bf16-output fast path: halves the dominant HBM writeback traffic.
    corr_bf16 = jax.block_until_ready(
        feature_correlation(featureA, featureB, out_dtype=jnp.bfloat16))
    assert corr_bf16.dtype == jnp.bfloat16
    assert jnp.allclose(corr_bf16.astype(jnp.float32), ref_matched,
                        atol=5e-2, rtol=2e-2), "mismatch on bf16-output path"

    # Documented full-f32 parity path (compute_dtype=None) for PyTorch checks.
    corr_f32 = jax.block_until_ready(
        feature_correlation(featureA, featureB, compute_dtype=None))
    assert jnp.allclose(corr_f32, ref_f32, atol=2e-3, rtol=2e-3), \
        "mismatch on f32 parity path"

    print("KERNEL_OK")
</pallas_src>

<mosaic_0001>
module attributes {stable_mosaic.version = 11 : i64} {
  func.func @_corr_kernel(%arg0: i32, %arg1: i32, %arg2: i32, %arg3: memref<1x4x256xf32, #tpu.memory_space<vmem>>, %arg4: memref<1x4x256xf32, #tpu.memory_space<vmem>>, %arg5: memref<1x256x256xf32, #tpu.memory_space<vmem>>) attributes {dimension_semantics = [#tpu.dimension_semantics<parallel>, #tpu.dimension_semantics<parallel>, #tpu.dimension_semantics<parallel>], iteration_bounds = array<i64: 2, 1, 1>, scalar_prefetch = 0 : i64, scratch_operands = 0 : i64, tpu.core_type = #tpu.core_type<tc>, window_params = [{transform_indices = @transform_0, window_bounds = array<i64: 1, 4, 256>}, {transform_indices = @transform_1, window_bounds = array<i64: 1, 4, 256>}, {transform_indices = @transform_2, window_bounds = array<i64: 1, 256, 256>}]} {
    %c0 = arith.constant 0 : index
    %c0_0 = arith.constant 0 : index
    %c0_1 = arith.constant 0 : index
    %0 = vector.load %arg3[%c0, %c0_0, %c0_1] : memref<1x4x256xf32, #tpu.memory_space<vmem>>, vector<1x4x256xf32>
    %1 = vector.shape_cast %0 : vector<1x4x256xf32> to vector<4x256xf32>
    %c0_2 = arith.constant 0 : index
    %c0_3 = arith.constant 0 : index
    %c0_4 = arith.constant 0 : index
    %2 = vector.load %arg4[%c0_2, %c0_3, %c0_4] : memref<1x4x256xf32, #tpu.memory_space<vmem>>, vector<1x4x256xf32>
    %3 = vector.shape_cast %2 : vector<1x4x256xf32> to vector<4x256xf32>
    %4 = arith.truncf %1 : vector<4x256xf32> to vector<4x256xbf16>
    %5 = arith.truncf %3 : vector<4x256xf32> to vector<4x256xbf16>
    %cst = arith.constant dense<0.000000e+00> : vector<256x256xf32>
    %6 = tpu.matmul %4, %5, %cst {dimension_numbers = #tpu.dot_dimension_numbers<[0], [0], [1], [1], [0, 1, 1, 1], [], []>} : vector<4x256xbf16>, vector<4x256xbf16>, vector<256x256xf32> -> vector<256x256xf32>
    %c0_5 = arith.constant 0 : index
    %c0_6 = arith.constant 0 : index
    %c0_7 = arith.constant 0 : index
    %7 = vector.load %arg5[%c0_5, %c0_6, %c0_7] : memref<1x256x256xf32, #tpu.memory_space<vmem>>, vector<1x256x256xf32>
    %8 = vector.shape_cast %7 : vector<1x256x256xf32> to vector<256x256xf32>
    %9 = vector.shape_cast %6 : vector<256x256xf32> to vector<1x256x256xf32>
    tpu.vector_store %arg5[%c0_5, %c0_6, %c0_7], %9 {strides = array<i32>} : memref<1x256x256xf32, #tpu.memory_space<vmem>>, vector<1x256x256xf32>,
    return
  }
  func.func @transform_0(%arg0: i32, %arg1: i32, %arg2: i32) -> (i32, i32, i32) {
    %c0_i32 = arith.constant 0 : i32
    %c0_i32_0 = arith.constant 0 : i32
    return %arg0, %c0_i32, %arg1 : i32, i32, i32
  }
  func.func @transform_1(%arg0: i32, %arg1: i32, %arg2: i32) -> (i32, i32, i32) {
    %c0_i32 = arith.constant 0 : i32
    %c0_i32_0 = arith.constant 0 : i32
    return %arg0, %c0_i32, %arg2 : i32, i32, i32
  }
  func.func @transform_2(%arg0: i32, %arg1: i32, %arg2: i32) -> (i32, i32, i32) {
    %c0_i32 = arith.constant 0 : i32
    return %arg0, %arg1, %arg2 : i32, i32, i32
  }
}

</mosaic_0001>

<llo_original>
// kernel: tpu_custom_call.1
$region0: #{tpu_custom_call.1}
  #allocation0 [shape = 'u32[]', space=smem, size = 0x4, offset = 0x4, fixed_abs, tag = 'smem constant byte address 0x4 - core index']
  #allocation1 [shape = 'u32[72,128]{1,0:T(1,128)}', space=vmem, size = 0x9000, scoped, tag = 'internal scratch']
  %s0 = inlined_call_operand.hbm [shape: f32[2,4,256], index: 0, kind: input, shape index: {}]
  %s1 = inlined_call_operand.hbm [shape: f32[2,4,256], index: 1, kind: input, shape index: {}]
  %s2 = inlined_call_operand.hbm [shape: f32[2,256,256], index: 2, kind: output, shape index: {}]
  %s3 = sld [smem:[#allocation0]]
  $region49: #{tpu_custom_call.1} parent=0
    _
  %s5 = ssub.s32 1, %s3
  %s6 = scalar_select 0, %s5, %s3
  $region1: #{tpu_custom_call.1} parent=0
    #allocation2 [shape = 'u8[8192]{0}', space=vmem, size = 0x2000, scoped, tag = 'input window, operand 0']
    #allocation3 [shape = 's32[2]{0}', space=sflag, size = 0x8, scoped, tag = 'scoped memory for tpu_custom_call.1']
    #allocation4 [shape = 's32[2]{0}', space=sflag, size = 0x8, scoped, tag = 'scoped memory for tpu_custom_call.1']
    #allocation5 [shape = 'u8[8192]{0}', space=vmem, size = 0x2000, scoped, tag = 'input window, operand 1']
    #allocation6 [shape = 's32[2]{0}', space=sflag, size = 0x8, scoped, tag = 'scoped memory for tpu_custom_call.1']
    #allocation7 [shape = 'u8[524288]{0}', space=vmem, size = 0x80000, scoped, tag = 'output window, operand 0']
    %7 = vsyncpa [#allocation3], 0
    %s8 = scalar_lea.sflag [#allocation3], 1
    %9 = vsyncpa %s8, 0
    %10 = vsyncpa [#allocation6], 0
    %s11 = scalar_lea.sflag [#allocation6], 1
    %12 = vsyncpa %s11, 0
    %13 = vsyncpa [#allocation4], 0
    %s14 = scalar_lea.sflag [#allocation4], 1
    %15 = vsyncpa %s14, 0
    loop: start=0, step=1, limit=4
    $region2: #{tpu_custom_call.1} parent=1 // loop_pre_header
      _
    $region3: #{tpu_custom_call.1} parent=1 // loop_header
      %s17 = sphi 0, %s21
      %p18 = scmp.ge.s32.totalorder %s17, 4
      %s24 = sphi 0, %s43
      %s25 = sphi 0, %s39
      %s26 = sphi 0, %s35
      %s27 = sphi 0, %s24
      %s28 = sphi 0, %s25
      %s29 = sphi 0, %s26
      %s30 = sphi 0, %s27
      %s31 = sphi 0, %s28
      %s32 = sphi 0, %s29
      %s48 = sphi 0, %s50
      %s51 = sphi 0, %s48
      %s52 = sphi 0, %s51
      %s68 = sphi 0, %s52
      %s76 = sphi 0, %s78
      %s79 = sphi 0, %s76
      %s80 = sphi 0, %s79
      %s96 = sphi 0, %s80
      %s106 = sphi 0, %s108
      %s109 = sphi 0, %s106
      %s110 = sphi 0, %s109
      %s126 = sphi 0, %s110
    $region4: #{tpu_custom_call.1} parent=1 // loop_header_branch
      %20 = sbr.rel (%p18) target = $region8
    $region5: #{tpu_custom_call.1} parent=1 // loop_body
      %s22 = ssub.s32 %s17, 1
      %s23 = ssub.s32 %s17, 2
      %s33 = sadd.s32 1, %s26
      %p34 = scmp.ge.s32.totalorder %s33, 1
      %s35 = scalar_select %p34, 0, %s33
      %s36 = sadd.s32 1, %s25
      %s37 = scalar_select %p34, %s36, %s25
      %p38 = scmp.ge.s32.totalorder %s37, 1
      %s39 = scalar_select %p38, 0, %s37
      %s40 = sadd.s32 1, %s24
      %s41 = scalar_select %p38, %s40, %s24
      %p42 = scmp.ge.s32.totalorder %s41, 2
      %s43 = scalar_select %p42, 0, %s41
      %s44 = ssub.s32 %s24, %s43
      %s45 = ssub.s32 %s25, %s39
      %s46 = sor.u32 %s44, %s45
      %p47 = scmp.eq.s32.totalorder %s46, 0
      %s49 = sadd.s32 %s48, 1
      %s50 = scalar_select %p47, %s48, %s49
      %p53 = pneg %p47
      %p54 = scmp.eq.s32.totalorder %s17, 1
      %p55 = por %p53, %p54
      %p56 = scmp.ne.s32.totalorder %s48, %s51
      %p57 = scmp.eq.s32.totalorder %s17, 0
      %p58 = por %p56, %p57
      %p59 = scmp.ne.s32.totalorder %s48, %s51
      %p60 = scmp.eq.s32.totalorder %s22, 1
      %p61 = por %p59, %p60
      %p62 = scmp.ne.s32.totalorder %s51, %s52
      %p63 = scmp.eq.s32.totalorder %s22, 0
      %p64 = por %p62, %p63
      %p65 = scmp.ne.s32.totalorder %s51, %s52
      %p66 = scmp.eq.s32.totalorder %s23, 1
      %p67 = por %p65, %p66
      %p69 = scmp.ne.s32.totalorder %s52, %s68
      %p70 = scmp.eq.s32.totalorder %s23, 0
      %p71 = por %p69, %p70
      %s72 = ssub.s32 %s24, %s43
      %s73 = ssub.s32 %s26, %s35
      %s74 = sor.u32 %s72, %s73
      %p75 = scmp.eq.s32.totalorder %s74, 0
      %s77 = sadd.s32 %s76, 1
      %s78 = scalar_select %p75, %s76, %s77
      %p81 = pneg %p75
      %p82 = scmp.eq.s32.totalorder %s17, 1
      %p83 = por %p81, %p82
      %p84 = scmp.ne.s32.totalorder %s76, %s79
      %p85 = scmp.eq.s32.totalorder %s17, 0
      %p86 = por %p84, %p85
      %p87 = scmp.ne.s32.totalorder %s76, %s79
      %p88 = scmp.eq.s32.totalorder %s22, 1
      %p89 = por %p87, %p88
      %p90 = scmp.ne.s32.totalorder %s79, %s80
      %p91 = scmp.eq.s32.totalorder %s22, 0
      %p92 = por %p90, %p91
      %p93 = scmp.ne.s32.totalorder %s79, %s80
      %p94 = scmp.eq.s32.totalorder %s23, 1
      %p95 = por %p93, %p94
      %p97 = scmp.ne.s32.totalorder %s80, %s96
      %p98 = scmp.eq.s32.totalorder %s23, 0
      %p99 = por %p97, %p98
      %s100 = ssub.s32 %s24, %s43
      %s101 = ssub.s32 %s25, %s39
      %s102 = sor.u32 %s100, %s101
      %s103 = ssub.s32 %s26, %s35
      %s104 = sor.u32 %s102, %s103
      %p105 = scmp.eq.s32.totalorder %s104, 0
      %s107 = sadd.s32 %s106, 1
      %s108 = scalar_select %p105, %s106, %s107
      %p111 = pneg %p105
      %p112 = scmp.eq.s32.totalorder %s17, 1
      %p113 = por %p111, %p112
      %p114 = scmp.ne.s32.totalorder %s106, %s109
      %p115 = scmp.eq.s32.totalorder %s17, 0
      %p116 = por %p114, %p115
      %p117 = scmp.ne.s32.totalorder %s106, %s109
      %p118 = scmp.eq.s32.totalorder %s22, 1
      %p119 = por %p117, %p118
      %p120 = scmp.ne.s32.totalorder %s109, %s110
      %p121 = scmp.eq.s32.totalorder %s22, 0
      %p122 = por %p120, %p121
      %p123 = scmp.ne.s32.totalorder %s109, %s110
      %p124 = scmp.eq.s32.totalorder %s23, 1
      %p125 = por %p123, %p124
      %p127 = scmp.ne.s32.totalorder %s110, %s126
      %p128 = scmp.eq.s32.totalorder %s23, 0
      %p129 = por %p127, %p128
      %p130 = scmp.le.s32.totalorder 1, %s17
      %p131 = scmp.lt.s32.totalorder %s17, 3
      %p132 = pnand %p130, %p131
      %p133 = pneg %p132
      // Predicated region
      $region9: #{tpu_custom_call.1} parent=5 // pred_check
        _
      $region10: #{tpu_custom_call.1} parent=5 // pred_check_branch
        %135 = sbr.rel (%p132) target = $region12
      $region11: #{tpu_custom_call.1} parent=5 // pred_region
        %s136 = ssub.s32 %s17, 1
      $region12: #{tpu_custom_call.1} parent=5 // pred_fallthru
        _
      %p137 = scmp.lt.s32.totalorder %s17, 2
      // Predicated region
      $region13: #{tpu_custom_call.1} parent=5 // pred_check
        %p138 = pneg %p137
      $region14: #{tpu_custom_call.1} parent=5 // pred_check_branch
        %140 = sbr.rel (%p138) target = $region16
      $region15: #{tpu_custom_call.1} parent=5 // pred_region
        // Predicated region
        $region17: #{tpu_custom_call.1} parent=15 // pred_check
          %p141 = pneg %p58
        $region18: #{tpu_custom_call.1} parent=15 // pred_check_branch
          %143 = sbr.rel (%p141) target = $region20
        $region19: #{tpu_custom_call.1} parent=15 // pred_region
          %s144 = sand.u32 %s48, 1
          %s145 = scalar_lea.sflag [#allocation3], %s144
          %s146 = sand.u32 %s48, 1
          %s147 = smul.addr %s146, 8
          %s148 = scalar_lea.vmem [#allocation2], %s147
          %s149 = smul.u32 2, %s25
          %151 = vsyncadd %s145, 0
          %s152 = smul.addr %s24, 2
          %s153 = sadd.s32 %s149, %s152
          %s154 = smul.addr %s153, 4
          %s155 = scalar_lea.hbm %s0, %s154
          %s157 = sshll.u32 %s155, 4
          %s158 = int_to_ptr.hbm [resolvable:$true] %s157
          %s159 = sshll.u32 %s148, 4
          %s160 = int_to_ptr.vmem [resolvable:$true] %s159
          %162 = dma.hbm_to_vmem [thread:$0]  %s158, 128, %s160, %s145
        $region20: #{tpu_custom_call.1} parent=15 // pred_fallthru
          _
        // Predicated region
        $region21: #{tpu_custom_call.1} parent=15 // pred_check
          %p163 = pneg %p86
        $region22: #{tpu_custom_call.1} parent=15 // pred_check_branch
          %165 = sbr.rel (%p163) target = $region24
        $region23: #{tpu_custom_call.1} parent=15 // pred_region
          %s166 = sand.u32 %s76, 1
          %s167 = scalar_lea.sflag [#allocation6], %s166
          %s168 = sand.u32 %s76, 1
          %s169 = smul.addr %s168, 8
          %s170 = scalar_lea.vmem [#allocation5], %s169
          %s171 = smul.u32 2, %s26
          %173 = vsyncadd %s167, 0
          %s174 = smul.addr %s24, 2
          %s175 = sadd.s32 %s171, %s174
          %s176 = smul.addr %s175, 4
          %s177 = scalar_lea.hbm %s1, %s176
          %s179 = sshll.u32 %s177, 4
          %s180 = int_to_ptr.hbm [resolvable:$true] %s179
          %s181 = sshll.u32 %s170, 4
          %s182 = int_to_ptr.vmem [resolvable:$true] %s181
          %184 = dma.hbm_to_vmem [thread:$0]  %s180, 128, %s182, %s167
        $region24: #{tpu_custom_call.1} parent=15 // pred_fallthru
          _
      $region16: #{tpu_custom_call.1} parent=5 // pred_fallthru
        _
      %p185 = scmp.le.s32.totalorder 1, %s17
      %p186 = scmp.lt.s32.totalorder %s17, 3
      %p187 = pnand %p185, %p186
      %p188 = pneg %p187
      // Predicated region
      $region25: #{tpu_custom_call.1} parent=5 // pred_check
        _
      $region26: #{tpu_custom_call.1} parent=5 // pred_check_branch
        %190 = sbr.rel (%p187) target = $region28
      $region27: #{tpu_custom_call.1} parent=5 // pred_region
        %s191 = ssub.s32 %s17, 1
        %s192 = sand.u32 %s51, 1
        %s193 = scalar_lea.sflag [#allocation3], %s192
        %s194 = sand.u32 %s51, 1
        %s195 = smul.addr %s194, 8
        %s196 = scalar_lea.vmem [#allocation2], %s195
        // Predicated region
        $region29: #{tpu_custom_call.1} parent=27 // pred_check
          %p197 = pneg %p64
        $region30: #{tpu_custom_call.1} parent=27 // pred_check_branch
          %199 = sbr.rel (%p197) target = $region32
        $region31: #{tpu_custom_call.1} parent=27 // pred_region
          %201 = dma.done %s193, 128
        $region32: #{tpu_custom_call.1} parent=27 // pred_fallthru
          _
        %s202 = sand.u32 %s79, 1
        %s203 = scalar_lea.sflag [#allocation6], %s202
        %s204 = sand.u32 %s79, 1
        %s205 = smul.addr %s204, 8
        %s206 = scalar_lea.vmem [#allocation5], %s205
        // Predicated region
        $region33: #{tpu_custom_call.1} parent=27 // pred_check
          %p207 = pneg %p92
        $region34: #{tpu_custom_call.1} parent=27 // pred_check_branch
          %209 = sbr.rel (%p207) target = $region36
        $region35: #{tpu_custom_call.1} parent=27 // pred_region
          %211 = dma.done %s203, 128
        $region36: #{tpu_custom_call.1} parent=27 // pred_fallthru
          _
        %s212 = sand.u32 %s51, 1
        %s213 = scalar_lea.sflag [#allocation3], %s212
        %s214 = sand.u32 %s51, 1
        %s215 = smul.addr %s214, 8
        %s216 = scalar_lea.vmem [#allocation2], %s215
        %p217 = pneg %p64
        %p218 = pneg %p61
        %s219 = sand.u32 %s79, 1
        %s220 = scalar_lea.sflag [#allocation6], %s219
        %s221 = sand.u32 %s79, 1
        %s222 = smul.addr %s221, 8
        %s223 = scalar_lea.vmem [#allocation5], %s222
        %p224 = pneg %p92
        %p225 = pneg %p89
        %p226 = pneg %p122
        %p227 = pneg %p119
        %s228 = sand.u32 %s109, 1
        %s229 = scalar_lea.sflag [#allocation4], %s228
        %s230 = sand.u32 %s109, 1
        %s231 = smul.addr %s230, 512
        %s232 = scalar_lea.vmem [#allocation7], %s231
        %s233 = smul.u32 2, %s28
        %s234 = smul.u32 2, %s29
        %s235 = smul.u32 32, %s28
        %s236 = smul.u32 2, %s29
        %v238 = vld [vmem:[%s196] sm:$0xff]
        %v239 = vld [vmem:[%s206] sm:$0xff]
        %241 = vst [vmem:[#allocation1] ss:$2 sm:$0xff] %v238
        %v242 = vld.sshfl [vmem:[#allocation1] sm:$0xff pattern:$0x75316420]
        %v243 = vld.sshfl [vmem:[#allocation1 + $0x8] sm:$0xff pattern:$0x75316420]
        %v246 = vpack.c.bf16 %v242, %v242
        %v247 = vpack.c.bf16 %v243, %v243
        %249 = vst [vmem:[#allocation1] ss:$2 sm:$0xff] %v239
        %v250 = vld.sshfl [vmem:[#allocation1] sm:$0xff pattern:$0x75316420]
        %v251 = vld.sshfl [vmem:[#allocation1 + $0x8] sm:$0xff pattern:$0x75316420]
        %v254 = vpack.c.bf16 %v250, %v250
        %v255 = vpack.c.bf16 %v251, %v251
        %256 = vxpose.binary.xlu0.c.b16.start [1/16] %v247, %v246, 128
        %257 = vxpose.binary.xlu0.c.b16.cont [2/16] 0, 0, 128
        %258 = vxpose.binary.xlu0.c.b16.cont [3/16] 0, 0, 128
        %259 = vxpose.binary.xlu0.c.b16.cont [4/16] 0, 0, 128
        %260 = vxpose.binary.xlu0.c.b16.cont [5/16] 0, 0, 128
        %261 = vxpose.binary.xlu0.c.b16.cont [6/16] 0, 0, 128
        %262 = vxpose.binary.xlu0.c.b16.cont [7/16] 0, 0, 128
        %263 = vxpose.binary.xlu0.c.b16.end [8/16] 0, 0, 128
        %v264 = vpop.trf.xlu0
        %v265 = vpop.trf.xlu0
        %v266 = vpop.trf.xlu0
        %v267 = vpop.trf.xlu0
        %v268 = vpop.trf.xlu0
        %v269 = vpop.trf.xlu0
        %v270 = vpop.trf.xlu0
        %v271 = vpop.trf.xlu0
        %v272 = vpop.trf.xlu0
        %v273 = vpop.trf.xlu0
        %v274 = vpop.trf.xlu0
        %v275 = vpop.trf.xlu0
        %v276 = vpop.trf.xlu0
        %v277 = vpop.trf.xlu0
        %v278 = vpop.trf.xlu0
        %v279 = vpop.trf.xlu0
        %vm280 = vcmask 31744
        %v282 = vsel %vm280, %v264, 0
        %v285 = vsel %vm280, %v266, 0
        %v288 = vsel %vm280, %v268, 0
        %v291 = vsel %vm280, %v270, 0
        %v294 = vsel %vm280, %v272, 0
        %v297 = vsel %vm280, %v274, 0
        %v300 = vsel %vm280, %v276, 0
        %v303 = vsel %vm280, %v278, 0
        %v306 = vsel %vm280, %v265, 0
        %v309 = vsel %vm280, %v267, 0
        %v312 = vsel %vm280, %v269, 0
        %v315 = vsel %vm280, %v271, 0
        %v318 = vsel %vm280, %v273, 0
        %v321 = vsel %vm280, %v275, 0
        %v324 = vsel %vm280, %v277, 0
        %v327 = vsel %vm280, %v279, 0
        %vm329 = vcmask 1041408
        %v331 = vsel %vm329, %v254, 0
        %v334 = vsel %vm329, %v255, 0
        %336 = vmatpush.bf16.msra.mxu0 0
        %337 = vmatpush.bf16.msra.mxu0 0
        %338 = vmatpush.bf16.msra.mxu0 0
        %339 = vmatpush.bf16.msra.mxu0 0
        %340 = vmatpush.bf16.msra.mxu0 0
        %341 = vmatpush.bf16.msra.mxu0 0
        %342 = vmatpush.bf16.msra.mxu0 0
        %343 = vmatpush.bf16.msra.mxu0 %v331
        %344 = vmatmul.bf16.gmra.mxu0 %v282
        %v345 = vpop.f32.mrf.mxu0
        %v346 = vadd.f32 0.0, %v345
        %v347 = vpop.f32.mrf.mxu0
        %v348 = vadd.f32 0.0, %v347
        %349 = vmatmul.bf16.gmra.mxu0 %v285
        %v350 = vpop.f32.mrf.mxu0
        %v351 = vadd.f32 0.0, %v350
        %v352 = vpop.f32.mrf.mxu0
        %v353 = vadd.f32 0.0, %v352
        %354 = vmatmul.bf16.gmra.mxu0 %v288
        %v355 = vpop.f32.mrf.mxu0
        %v356 = vadd.f32 0.0, %v355
        %v357 = vpop.f32.mrf.mxu0
        %v358 = vadd.f32 0.0, %v357
        %359 = vmatmul.bf16.gmra.mxu0 %v291
        %v360 = vpop.f32.mrf.mxu0
        %v361 = vadd.f32 0.0, %v360
        %v362 = vpop.f32.mrf.mxu0
        %v363 = vadd.f32 0.0, %v362
        %364 = vmatmul.bf16.gmra.mxu0 %v294
        %v365 = vpop.f32.mrf.mxu0
        %v366 = vadd.f32 0.0, %v365
        %v367 = vpop.f32.mrf.mxu0
        %v368 = vadd.f32 0.0, %v367
        %369 = vmatmul.bf16.gmra.mxu0 %v297
        %v370 = vpop.f32.mrf.mxu0
        %v371 = vadd.f32 0.0, %v370
        %v372 = vpop.f32.mrf.mxu0
        %v373 = vadd.f32 0.0, %v372
        %374 = vmatmul.bf16.gmra.mxu0 %v300
        %v375 = vpop.f32.mrf.mxu0
        %v376 = vadd.f32 0.0, %v375
        %v377 = vpop.f32.mrf.mxu0
        %v378 = vadd.f32 0.0, %v377
        %379 = vmatmul.bf16.gmra.mxu0 %v303
        %v380 = vpop.f32.mrf.mxu0
        %v381 = vadd.f32 0.0, %v380
        %v382 = vpop.f32.mrf.mxu0
        %v383 = vadd.f32 0.0, %v382
        %384 = vmatmul.bf16.gmra.mxu0 %v306
        %v385 = vpop.f32.mrf.mxu0
        %v386 = vadd.f32 0.0, %v385
        %v387 = vpop.f32.mrf.mxu0
        %v388 = vadd.f32 0.0, %v387
        %389 = vmatmul.bf16.gmra.mxu0 %v309
        %v390 = vpop.f32.mrf.mxu0
        %v391 = vadd.f32 0.0, %v390
        %v392 = vpop.f32.mrf.mxu0
        %v393 = vadd.f32 0.0, %v392
        %394 = vmatmul.bf16.gmra.mxu0 %v312
        %v395 = vpop.f32.mrf.mxu0
        %v396 = vadd.f32 0.0, %v395
        %v397 = vpop.f32.mrf.mxu0
        %v398 = vadd.f32 0.0, %v397
        %399 = vmatmul.bf16.gmra.mxu0 %v315
        %v400 = vpop.f32.mrf.mxu0
        %v401 = vadd.f32 0.0, %v400
        %v402 = vpop.f32.mrf.mxu0
        %v403 = vadd.f32 0.0, %v402
        %404 = vmatmul.bf16.gmra.mxu0 %v318
        %v405 = vpop.f32.mrf.mxu0
        %v406 = vadd.f32 0.0, %v405
        %v407 = vpop.f32.mrf.mxu0
        %v408 = vadd.f32 0.0, %v407
        %409 = vmatmul.bf16.gmra.mxu0 %v321
        %v410 = vpop.f32.mrf.mxu0
        %v411 = vadd.f32 0.0, %v410
        %v412 = vpop.f32.mrf.mxu0
        %v413 = vadd.f32 0.0, %v412
        %414 = vmatmul.bf16.gmra.mxu0 %v324
        %v415 = vpop.f32.mrf.mxu0
        %v416 = vadd.f32 0.0, %v415
        %v417 = vpop.f32.mrf.mxu0
        %v418 = vadd.f32 0.0, %v417
        %419 = vmatmul.bf16.gmra.mxu0 %v327
        %v420 = vpop.f32.mrf.mxu0
        %v421 = vadd.f32 0.0, %v420
        %v422 = vpop.f32.mrf.mxu0
        %v423 = vadd.f32 0.0, %v422
        %424 = vdwg.mxu0
        %425 = vmatpush.bf16.msra.mxu0 0
        %426 = vmatpush.bf16.msra.mxu0 0
        %427 = vmatpush.bf16.msra.mxu0 0
        %428 = vmatpush.bf16.msra.mxu0 0
        %429 = vmatpush.bf16.msra.mxu0 0
        %430 = vmatpush.bf16.msra.mxu0 0
        %431 = vmatpush.bf16.msra.mxu0 0
        %432 = vmatpush.bf16.msra.mxu0 %v334
        %433 = vmatmul.bf16.gmra.mxu0 %v282
        %v434 = vpop.f32.mrf.mxu0
        %v435 = vadd.f32 0.0, %v434
        %v436 = vpop.f32.mrf.mxu0
        %v437 = vadd.f32 0.0, %v436
        %438 = vmatmul.bf16.gmra.mxu0 %v285
        %v439 = vpop.f32.mrf.mxu0
        %v440 = vadd.f32 0.0, %v439
        %v441 = vpop.f32.mrf.mxu0
        %v442 = vadd.f32 0.0, %v441
        %443 = vmatmul.bf16.gmra.mxu0 %v288
        %v444 = vpop.f32.mrf.mxu0
        %v445 = vadd.f32 0.0, %v444
        %v446 = vpop.f32.mrf.mxu0
        %v447 = vadd.f32 0.0, %v446
        %448 = vmatmul.bf16.gmra.mxu0 %v291
        %v449 = vpop.f32.mrf.mxu0
        %v450 = vadd.f32 0.0, %v449
        %v451 = vpop.f32.mrf.mxu0
        %v452 = vadd.f32 0.0, %v451
        %453 = vmatmul.bf16.gmra.mxu0 %v294
        %v454 = vpop.f32.mrf.mxu0
        %v455 = vadd.f32 0.0, %v454
        %v456 = vpop.f32.mrf.mxu0
        %v457 = vadd.f32 0.0, %v456
        %458 = vmatmul.bf16.gmra.mxu0 %v297
        %v459 = vpop.f32.mrf.mxu0
        %v460 = vadd.f32 0.0, %v459
        %v461 = vpop.f32.mrf.mxu0
        %v462 = vadd.f32 0.0, %v461
        %463 = vmatmul.bf16.gmra.mxu0 %v300
        %v464 = vpop.f32.mrf.mxu0
        %v465 = vadd.f32 0.0, %v464
        %v466 = vpop.f32.mrf.mxu0
        %v467 = vadd.f32 0.0, %v466
        %468 = vmatmul.bf16.gmra.mxu0 %v303
        %v469 = vpop.f32.mrf.mxu0
        %v470 = vadd.f32 0.0, %v469
        %v471 = vpop.f32.mrf.mxu0
        %v472 = vadd.f32 0.0, %v471
        %473 = vmatmul.bf16.gmra.mxu0 %v306
        %v474 = vpop.f32.mrf.mxu0
        %v475 = vadd.f32 0.0, %v474
        %v476 = vpop.f32.mrf.mxu0
        %v477 = vadd.f32 0.0, %v476
        %478 = vmatmul.bf16.gmra.mxu0 %v309
        %v479 = vpop.f32.mrf.mxu0
        %v480 = vadd.f32 0.0, %v479
        %v481 = vpop.f32.mrf.mxu0
        %v482 = vadd.f32 0.0, %v481
        %483 = vmatmul.bf16.gmra.mxu0 %v312
        %v484 = vpop.f32.mrf.mxu0
        %v485 = vadd.f32 0.0, %v484
        %v486 = vpop.f32.mrf.mxu0
        %v487 = vadd.f32 0.0, %v486
        %488 = vmatmul.bf16.gmra.mxu0 %v315
        %v489 = vpop.f32.mrf.mxu0
        %v490 = vadd.f32 0.0, %v489
        %v491 = vpop.f32.mrf.mxu0
        %v492 = vadd.f32 0.0, %v491
        %493 = vmatmul.bf16.gmra.mxu0 %v318
        %v494 = vpop.f32.mrf.mxu0
        %v495 = vadd.f32 0.0, %v494
        %v496 = vpop.f32.mrf.mxu0
        %v497 = vadd.f32 0.0, %v496
        %498 = vmatmul.bf16.gmra.mxu0 %v321
        %v499 = vpop.f32.mrf.mxu0
        %v500 = vadd.f32 0.0, %v499
        %v501 = vpop.f32.mrf.mxu0
        %v502 = vadd.f32 0.0, %v501
        %503 = vmatmul.bf16.gmra.mxu0 %v324
        %v504 = vpop.f32.mrf.mxu0
        %v505 = vadd.f32 0.0, %v504
        %v506 = vpop.f32.mrf.mxu0
        %v507 = vadd.f32 0.0, %v506
        %508 = vmatmul.bf16.gmra.mxu0 %v327
        %v509 = vpop.f32.mrf.mxu0
        %v510 = vadd.f32 0.0, %v509
        %v511 = vpop.f32.mrf.mxu0
        %v512 = vadd.f32 0.0, %v511
        %513 = vdwg.mxu0
        %514 = vst [vmem:[%s232] sm:$0xff] %v346
        %515 = vst [vmem:[%s232 + $0x8] sm:$0xff] %v435
        %516 = vst [vmem:[%s232 + $0x10] sm:$0xff] %v348
        %517 = vst [vmem:[%s232 + $0x18] sm:$0xff] %v437
        %518 = vst [vmem:[%s232 + $0x20] sm:$0xff] %v351
        %519 = vst [vmem:[%s232 + $0x28] sm:$0xff] %v440
        %520 = vst [vmem:[%s232 + $0x30] sm:$0xff] %v353
        %521 = vst [vmem:[%s232 + $0x38] sm:$0xff] %v442
        %522 = vst [vmem:[%s232 + $0x40] sm:$0xff] %v356
        %523 = vst [vmem:[%s232 + $0x48] sm:$0xff] %v445
        %524 = vst [vmem:[%s232 + $0x50] sm:$0xff] %v358
        %525 = vst [vmem:[%s232 + $0x58] sm:$0xff] %v447
        %526 = vst [vmem:[%s232 + $0x60] sm:$0xff] %v361
        %527 = vst [vmem:[%s232 + $0x68] sm:$0xff] %v450
        %528 = vst [vmem:[%s232 + $0x70] sm:$0xff] %v363
        %529 = vst [vmem:[%s232 + $0x78] sm:$0xff] %v452
        %530 = vst [vmem:[%s232 + $0x80] sm:$0xff] %v366
        %531 = vst [vmem:[%s232 + $0x88] sm:$0xff] %v455
        %532 = vst [vmem:[%s232 + $0x90] sm:$0xff] %v368
        %533 = vst [vmem:[%s232 + $0x98] sm:$0xff] %v457
        %534 = vst [vmem:[%s232 + $0xa0] sm:$0xff] %v371
        %535 = vst [vmem:[%s232 + $0xa8] sm:$0xff] %v460
        %536 = vst [vmem:[%s232 + $0xb0] sm:$0xff] %v373
        %537 = vst [vmem:[%s232 + $0xb8] sm:$0xff] %v462
        %538 = vst [vmem:[%s232 + $0xc0] sm:$0xff] %v376
        %539 = vst [vmem:[%s232 + $0xc8] sm:$0xff] %v465
        %540 = vst [vmem:[%s232 + $0xd0] sm:$0xff] %v378
        %541 = vst [vmem:[%s232 + $0xd8] sm:$0xff] %v467
        %542 = vst [vmem:[%s232 + $0xe0] sm:$0xff] %v381
        %543 = vst [vmem:[%s232 + $0xe8] sm:$0xff] %v470
        %544 = vst [vmem:[%s232 + $0xf0] sm:$0xff] %v383
        %545 = vst [vmem:[%s232 + $0xf8] sm:$0xff] %v472
        %546 = vst [vmem:[%s232 + $0x100] sm:$0xff] %v386
        %547 = vst [vmem:[%s232 + $0x108] sm:$0xff] %v475
        %548 = vst [vmem:[%s232 + $0x110] sm:$0xff] %v388
        %549 = vst [vmem:[%s232 + $0x118] sm:$0xff] %v477
        %550 = vst [vmem:[%s232 + $0x120] sm:$0xff] %v391
        %551 = vst [vmem:[%s232 + $0x128] sm:$0xff] %v480
        %552 = vst [vmem:[%s232 + $0x130] sm:$0xff] %v393
        %553 = vst [vmem:[%s232 + $0x138] sm:$0xff] %v482
        %554 = vst [vmem:[%s232 + $0x140] sm:$0xff] %v396
        %555 = vst [vmem:[%s232 + $0x148] sm:$0xff] %v485
        %556 = vst [vmem:[%s232 + $0x150] sm:$0xff] %v398
        %557 = vst [vmem:[%s232 + $0x158] sm:$0xff] %v487
        %558 = vst [vmem:[%s232 + $0x160] sm:$0xff] %v401
        %559 = vst [vmem:[%s232 + $0x168] sm:$0xff] %v490
        %560 = vst [vmem:[%s232 + $0x170] sm:$0xff] %v403
        %561 = vst [vmem:[%s232 + $0x178] sm:$0xff] %v492
        %562 = vst [vmem:[%s232 + $0x180] sm:$0xff] %v406
        %563 = vst [vmem:[%s232 + $0x188] sm:$0xff] %v495
        %564 = vst [vmem:[%s232 + $0x190] sm:$0xff] %v408
        %565 = vst [vmem:[%s232 + $0x198] sm:$0xff] %v497
        %566 = vst [vmem:[%s232 + $0x1a0] sm:$0xff] %v411
        %567 = vst [vmem:[%s232 + $0x1a8] sm:$0xff] %v500
        %568 = vst [vmem:[%s232 + $0x1b0] sm:$0xff] %v413
        %569 = vst [vmem:[%s232 + $0x1b8] sm:$0xff] %v502
        %570 = vst [vmem:[%s232 + $0x1c0] sm:$0xff] %v416
        %571 = vst [vmem:[%s232 + $0x1c8] sm:$0xff] %v505
        %572 = vst [vmem:[%s232 + $0x1d0] sm:$0xff] %v418
        %573 = vst [vmem:[%s232 + $0x1d8] sm:$0xff] %v507
        %574 = vst [vmem:[%s232 + $0x1e0] sm:$0xff] %v421
        %575 = vst [vmem:[%s232 + $0x1e8] sm:$0xff] %v510
        %576 = vst [vmem:[%s232 + $0x1f0] sm:$0xff] %v423
        %577 = vst [vmem:[%s232 + $0x1f8] sm:$0xff] %v512
        %s578 = sand.u32 %s109, 1
        %s579 = scalar_lea.sflag [#allocation4], %s578
        %s580 = sand.u32 %s109, 1
        %s581 = smul.addr %s580, 512
        %s582 = scalar_lea.vmem [#allocation7], %s581
        // Predicated region
        $region37: #{tpu_custom_call.1} parent=27 // pred_check
          %p583 = pneg %p119
        $region38: #{tpu_custom_call.1} parent=27 // pred_check_branch
          %585 = sbr.rel (%p583) target = $region40
        $region39: #{tpu_custom_call.1} parent=27 // pred_region
          %s586 = smul.u32 32, %s28
          %s587 = smul.u32 2, %s29
          %589 = vsyncadd %s579, 0
          %s590 = smul.addr %s586, 2
          %s591 = sadd.s32 %s587, %s590
          %s592 = smul.addr %s27, 64
          %s593 = sadd.s32 %s591, %s592
          %s594 = smul.addr %s593, 8
          %s595 = scalar_lea.hbm %s2, %s594
          %s596 = sshll.u32 %s582, 4
          %s597 = int_to_ptr.vmem [resolvable:$true] %s596
          %s598 = sshll.u32 %s595, 4
          %s599 = int_to_ptr.hbm [resolvable:$true] %s598
          %604 = dma.vmem_to_hbm [thread:$0]  %s597, 8192, %s599, %s579, 256, 256, 16
        $region40: #{tpu_custom_call.1} parent=27 // pred_fallthru
          _
      $region28: #{tpu_custom_call.1} parent=5 // pred_fallthru
        _
      %p605 = scmp.le.s32.totalorder 2, %s17
      // Predicated region
      $region41: #{tpu_custom_call.1} parent=5 // pred_check
        %p606 = pneg %p605
      $region42: #{tpu_custom_call.1} parent=5 // pred_check_branch
        %608 = sbr.rel (%p606) target = $region44
      $region43: #{tpu_custom_call.1} parent=5 // pred_region
        %s609 = ssub.s32 %s17, 2
        // Predicated region
        $region45: #{tpu_custom_call.1} parent=43 // pred_check
          %p610 = pneg %p125
        $region46: #{tpu_custom_call.1} parent=43 // pred_check_branch
          %612 = sbr.rel (%p610) target = $region48
        $region47: #{tpu_custom_call.1} parent=43 // pred_region
          %s613 = sand.u32 %s110, 1
          %s614 = scalar_lea.sflag [#allocation4], %s613
          %s615 = sand.u32 %s110, 1
          %s616 = smul.addr %s615, 512
          %s617 = scalar_lea.vmem [#allocation7], %s616
          %619 = dma.done %s614, 8192
        $region48: #{tpu_custom_call.1} parent=43 // pred_fallthru
          _
      $region44: #{tpu_custom_call.1} parent=5 // pred_fallthru
        _
    $region6: #{tpu_custom_call.1} parent=1 // loop_footer
      %s21 = sadd.s32 1, %s17
    $region7: #{tpu_custom_call.1} parent=1 // loop_footer_branch
      %16 = sbr.rel target = $region3
    $region8: #{tpu_custom_call.1} parent=1 // loop_exit
      _
    %620 = vsyncpa [#allocation3], 1
    %s621 = scalar_lea.sflag [#allocation3], 1
    %622 = vsyncpa %s621, 1
    %623 = vsyncpa [#allocation6], 1
    %s624 = scalar_lea.sflag [#allocation6], 1
    %625 = vsyncpa %s624, 1
    %626 = vsyncpa [#allocation4], 1
    %s627 = scalar_lea.sflag [#allocation4], 1
    %628 = vsyncpa %s627, 1

</llo_original>
